<compile_context>
chip_gen: v7x
topology: tpu7x:2x2x1
jax: 0.10.0
libtpu: 0.0.40
codegen_flags: <defaults>
</compile_context>

<pallas_src>
import functools

import jax
import jax.numpy as jnp
from jax.experimental import pallas as pl
from jax.experimental.pallas import tpu as pltpu

_LANE = 128
_SUBLANE = 8


def _round_up(x, m):
    return ((x + m - 1) // m) * m


def _mlp_kernel(x_ref, w_in_ref, b_in_ref, w_hid_ref, b_hid_ref,
                w_out_ref, b_out_ref, o_ref, *, num_hidden_layers, mxu_dtype):
    """One batch tile; activations carried as (features, batch) = (sublane, lane).

    Shapes inside the kernel:
      x_ref     (d_in, tile_m)      w_in_ref  (H, d_in)      b_in_ref (H, 1)
      w_hid_ref (L, H, H)  (pre-transposed so h_new = w_hid[l] @ h)
      b_hid_ref (L, H, 1)
      w_out_ref (d_out_pad, H)      b_out_ref (d_out_pad, 1)
      o_ref     (d_out_pad, tile_m)
    """
    x = x_ref[...].astype(jnp.float32)
    d_in = x.shape[0]

    # Input projection on the VPU: h = W_in^T x as a sum of rank-1 broadcasts.
    w_in = w_in_ref[...].astype(jnp.float32)
    h = w_in[:, 0:1] * x[0:1, :]
    for k in range(1, d_in):
        h = h + w_in[:, k:k + 1] * x[k:k + 1, :]
    h = jnp.maximum(h + b_in_ref[...], 0.0)

    # Hidden layers: bf16 MXU operands, f32 accumulate, f32 bias/ReLU.
    for l in range(num_hidden_layers):
        w = w_hid_ref[l].astype(mxu_dtype)
        h = jnp.dot(w, h.astype(mxu_dtype), preferred_element_type=jnp.float32)
        h = jnp.maximum(h + b_hid_ref[l], 0.0)

    # Output projection: only d_out_pad (=8) output rows of work.
    w_out = w_out_ref[...].astype(mxu_dtype)
    y = jnp.dot(w_out, h.astype(mxu_dtype), preferred_element_type=jnp.float32)
    y = y + b_out_ref[...]
    # Exact sigmoid (the v2 approx-reciprocal was the accuracy failure).
    y = 1.0 / (1.0 + jnp.exp(-y))

    o_ref[...] = y.astype(o_ref.dtype)


def _choose_tiling(batch, max_tile=2048):
    """Batch padding/tiling: the lane axis (batch) must be a multiple of 128."""
    b_pad = _round_up(batch, _LANE)
    if b_pad <= max_tile:
        return b_pad, b_pad                 # single block
    b_pad = _round_up(batch, max_tile)
    return b_pad, max_tile


def imgdigest_forward(x, params, *, use_bf16_mxu=True, max_tile=2048):
    """Pallas MLP forward matching the torch imgdigest module.

    x:      [B, D_in]  float32
    params: dict with
      w_in  [D_in, H],  b_in  [1, H]
      w_hid [L, H, H],  b_hid [L, 1, H]
      w_out [H, D_out], b_out [1, D_out]
    Returns [B, D_out].
    """
    w_in, b_in = params["w_in"], params["b_in"]
    w_hid, b_hid = params["w_hid"], params["b_hid"]
    w_out, b_out = params["w_out"], params["b_out"]

    B, d_in = x.shape
    L, H, _ = w_hid.shape
    d_out = w_out.shape[1]

    B_pad, tile_m = _choose_tiling(B, max_tile)
    n_tiles = B_pad // tile_m

    # Feature-on-sublane / batch-on-lane layout: x as (d_in, B_pad).
    x_t = jnp.pad(x.T, ((0, 0), (0, B_pad - B)))

    # Pre-transpose weights so every layer is h_new = W @ h (column activations).
    w_in_t = w_in.T                           # (H, d_in)
    b_in_t = b_in.T                           # (H, 1)
    w_hid_t = jnp.swapaxes(w_hid, 1, 2)       # (L, H, H)
    b_hid_t = jnp.swapaxes(b_hid, 1, 2)       # (L, H, 1)

    # Output rows padded only to the 8-sublane granule (3 -> 8), not 128 lanes.
    d_out_pad = _round_up(d_out, _SUBLANE)
    w_out_t = jnp.pad(w_out.T, ((0, d_out_pad - d_out), (0, 0)))   # (d_out_pad, H)
    b_out_t = jnp.pad(b_out.T, ((0, d_out_pad - d_out), (0, 0)))   # (d_out_pad, 1)

    mxu_dtype = jnp.bfloat16 if use_bf16_mxu else jnp.float32
    kernel = functools.partial(_mlp_kernel, num_hidden_layers=L,
                               mxu_dtype=mxu_dtype)

    cost = pl.CostEstimate(
        flops=2 * B_pad * (d_in * H + L * H * H + H * d_out_pad),
        transcendentals=B_pad * d_out_pad,                 # exp in the sigmoid
        bytes_accessed=4 * (d_in * B_pad + H * d_in + H + L * H * H + L * H
                            + d_out_pad * H + d_out_pad + d_out_pad * B_pad),
    )

    out = pl.pallas_call(
        kernel,
        out_shape=jax.ShapeDtypeStruct((d_out_pad, B_pad), x.dtype),
        grid_spec=pltpu.PrefetchScalarGridSpec(
            num_scalar_prefetch=0,
            grid=(n_tiles,),
            in_specs=[
                # batch tile of the (transposed) input
                pl.BlockSpec((d_in, tile_m), lambda i: (0, i)),
                # parameters: full arrays, resident for every grid step
                pl.BlockSpec((H, d_in), lambda i: (0, 0)),
                pl.BlockSpec((H, 1), lambda i: (0, 0)),
                pl.BlockSpec((L, H, H), lambda i: (0, 0, 0)),
                pl.BlockSpec((L, H, 1), lambda i: (0, 0, 0)),
                pl.BlockSpec((d_out_pad, H), lambda i: (0, 0)),
                pl.BlockSpec((d_out_pad, 1), lambda i: (0, 0)),
            ],
            out_specs=pl.BlockSpec((d_out_pad, tile_m), lambda i: (0, i)),
        ),
        compiler_params=pltpu.CompilerParams(
            dimension_semantics=("parallel",)),
        cost_estimate=cost,
    )(x_t, w_in_t, b_in_t, w_hid_t, b_hid_t, w_out_t, b_out_t)

    # TODO(synk): consumers that accept the (d_out_pad, B_pad) layout should
    # skip this slice+transpose; kept to match the torch module's [B, d_out].
    return out[:d_out, :B].T


def init_params(key, input_dim, hidden_dim, output_dim, num_hidden_layers):
    """Deterministic synthetic parameters (torch Linear shapes, stored transposed)."""
    ks = jax.random.split(key, 6)
    scale = 0.1
    w_in = scale * jax.random.normal(ks[0], (input_dim, hidden_dim), jnp.float32)
    b_in = scale * jax.random.normal(ks[1], (1, hidden_dim), jnp.float32)
    w_hid = scale * jax.random.normal(
        ks[2], (num_hidden_layers, hidden_dim, hidden_dim), jnp.float32)
    b_hid = scale * jax.random.normal(
        ks[3], (num_hidden_layers, 1, hidden_dim), jnp.float32)
    w_out = scale * jax.random.normal(ks[4], (hidden_dim, output_dim), jnp.float32)
    b_out = scale * jax.random.normal(ks[5], (1, output_dim), jnp.float32)
    return dict(w_in=w_in, b_in=b_in, w_hid=w_hid, b_hid=b_hid,
                w_out=w_out, b_out=b_out)


def reference_forward(x, params):
    """Pure-JAX reference of the torch module's forward."""
    h = jnp.maximum(x @ params["w_in"] + params["b_in"], 0.0)
    for l in range(params["w_hid"].shape[0]):
        h = jnp.maximum(h @ params["w_hid"][l] + params["b_hid"][l], 0.0)
    y = h @ params["w_out"] + params["b_out"]
    return jax.nn.sigmoid(y)


if __name__ == "__main__":
    # model_config: input_dim=2 (2D coordinates), hidden_dim=32,
    # num_hidden_layers=2, output_dim=3
    input_dim, hidden_dim, output_dim, num_hidden_layers = 2, 32, 3, 2
    batch = 16

    key = jax.random.PRNGKey(0)
    kx, kp = jax.random.split(key)
    x = jax.random.normal(kx, (batch, input_dim), jnp.float32)
    params = init_params(kp, input_dim, hidden_dim, output_dim, num_hidden_layers)

    fwd = jax.jit(imgdigest_forward)
    out = jax.block_until_ready(fwd(x, params))

    ref = reference_forward(x, params)
    assert out.shape == (batch, output_dim)
    # Sigmoid is exact now; the only error source is bf16 MXU operands
    # (f32 accumulate) through the stacked 32-wide matmuls (~few e-4).
    assert jnp.allclose(out, ref, atol=2e-3, rtol=2e-3), "mismatch vs reference"

    print("KERNEL_OK")
</pallas_src>

<mosaic_0001>
module attributes {stable_mosaic.version = 11 : i64} {
  func.func @_mlp_kernel(%arg0: i32, %arg1: memref<2x128xf32, #tpu.memory_space<vmem>>, %arg2: memref<32x2xf32, #tpu.memory_space<vmem>>, %arg3: memref<32x1xf32, #tpu.memory_space<vmem>>, %arg4: memref<2x32x32xf32, #tpu.memory_space<vmem>>, %arg5: memref<2x32x1xf32, #tpu.memory_space<vmem>>, %arg6: memref<8x32xf32, #tpu.memory_space<vmem>>, %arg7: memref<8x1xf32, #tpu.memory_space<vmem>>, %arg8: memref<8x128xf32, #tpu.memory_space<vmem>>) attributes {dimension_semantics = [#tpu.dimension_semantics<parallel>], iteration_bounds = array<i64: 1>, scalar_prefetch = 0 : i64, scratch_operands = 0 : i64, tpu.core_type = #tpu.core_type<tc>, window_params = [{transform_indices = @transform_0, window_bounds = array<i64: 2, 128>}, {pipeline_mode = #tpu.pipeline_mode<synchronous>, transform_indices = @transform_1, window_bounds = array<i64: 32, 2>}, {pipeline_mode = #tpu.pipeline_mode<synchronous>, transform_indices = @transform_2, window_bounds = array<i64: 32, 1>}, {pipeline_mode = #tpu.pipeline_mode<synchronous>, transform_indices = @transform_3, window_bounds = array<i64: 2, 32, 32>}, {pipeline_mode = #tpu.pipeline_mode<synchronous>, transform_indices = @transform_4, window_bounds = array<i64: 2, 32, 1>}, {pipeline_mode = #tpu.pipeline_mode<synchronous>, transform_indices = @transform_5, window_bounds = array<i64: 8, 32>}, {pipeline_mode = #tpu.pipeline_mode<synchronous>, transform_indices = @transform_6, window_bounds = array<i64: 8, 1>}, {transform_indices = @transform_7, window_bounds = array<i64: 8, 128>}]} {
    %c0 = arith.constant 0 : index
    %c0_0 = arith.constant 0 : index
    %0 = vector.load %arg1[%c0, %c0_0] : memref<2x128xf32, #tpu.memory_space<vmem>>, vector<2x128xf32>
    %c0_1 = arith.constant 0 : index
    %c0_2 = arith.constant 0 : index
    %1 = vector.load %arg2[%c0_1, %c0_2] : memref<32x2xf32, #tpu.memory_space<vmem>>, vector<32x2xf32>
    %2 = vector.extract_strided_slice %1 {offsets = [0, 0], sizes = [32, 1], strides = [1, 1]} : vector<32x2xf32> to vector<32x1xf32>
    %3 = vector.extract_strided_slice %0 {offsets = [0, 0], sizes = [1, 128], strides = [1, 1]} : vector<2x128xf32> to vector<1x128xf32>
    %4 = vector.broadcast %2 : vector<32x1xf32> to vector<32x128xf32>
    %5 = vector.broadcast %3 : vector<1x128xf32> to vector<32x128xf32>
    %6 = arith.mulf %4, %5 : vector<32x128xf32>
    %7 = vector.extract_strided_slice %1 {offsets = [0, 1], sizes = [32, 1], strides = [1, 1]} : vector<32x2xf32> to vector<32x1xf32>
    %8 = vector.extract_strided_slice %0 {offsets = [1, 0], sizes = [1, 128], strides = [1, 1]} : vector<2x128xf32> to vector<1x128xf32>
    %9 = vector.broadcast %7 : vector<32x1xf32> to vector<32x128xf32>
    %10 = vector.broadcast %8 : vector<1x128xf32> to vector<32x128xf32>
    %11 = arith.mulf %9, %10 : vector<32x128xf32>
    %12 = arith.addf %6, %11 : vector<32x128xf32>
    %c0_3 = arith.constant 0 : index
    %c0_4 = arith.constant 0 : index
    %13 = vector.load %arg3[%c0_3, %c0_4] : memref<32x1xf32, #tpu.memory_space<vmem>>, vector<32x1xf32>
    %14 = vector.broadcast %13 : vector<32x1xf32> to vector<32x128xf32>
    %15 = arith.addf %12, %14 : vector<32x128xf32>
    %cst = arith.constant 0.000000e+00 : f32
    %16 = vector.broadcast %cst : f32 to vector<32x128xf32>
    %17 = arith.maximumf %15, %16 : vector<32x128xf32>
    %c0_5 = arith.constant 0 : index
    %c0_6 = arith.constant 0 : index
    %c0_7 = arith.constant 0 : index
    %18 = vector.load %arg4[%c0_5, %c0_6, %c0_7] : memref<2x32x32xf32, #tpu.memory_space<vmem>>, vector<1x32x32xf32>
    %19 = vector.shape_cast %18 : vector<1x32x32xf32> to vector<32x32xf32>
    %20 = arith.truncf %19 : vector<32x32xf32> to vector<32x32xbf16>
    %21 = arith.truncf %17 : vector<32x128xf32> to vector<32x128xbf16>
    %cst_8 = arith.constant dense<0.000000e+00> : vector<32x128xf32>
    %22 = tpu.matmul %20, %21, %cst_8 {dimension_numbers = #tpu.dot_dimension_numbers<[1], [0], [0], [1], [0, 0, 1, 1], [], []>} : vector<32x32xbf16>, vector<32x128xbf16>, vector<32x128xf32> -> vector<32x128xf32>
    %c0_9 = arith.constant 0 : index
    %c0_10 = arith.constant 0 : index
    %c0_11 = arith.constant 0 : index
    %23 = vector.load %arg5[%c0_9, %c0_10, %c0_11] : memref<2x32x1xf32, #tpu.memory_space<vmem>>, vector<1x32x1xf32>
    %24 = vector.shape_cast %23 : vector<1x32x1xf32> to vector<32x1xf32>
    %25 = vector.broadcast %24 : vector<32x1xf32> to vector<32x128xf32>
    %26 = arith.addf %22, %25 : vector<32x128xf32>
    %cst_12 = arith.constant 0.000000e+00 : f32
    %27 = vector.broadcast %cst_12 : f32 to vector<32x128xf32>
    %28 = arith.maximumf %26, %27 : vector<32x128xf32>
    %c1 = arith.constant 1 : index
    %c0_13 = arith.constant 0 : index
    %c0_14 = arith.constant 0 : index
    %29 = vector.load %arg4[%c1, %c0_13, %c0_14] : memref<2x32x32xf32, #tpu.memory_space<vmem>>, vector<1x32x32xf32>
    %30 = vector.shape_cast %29 : vector<1x32x32xf32> to vector<32x32xf32>
    %31 = arith.truncf %30 : vector<32x32xf32> to vector<32x32xbf16>
    %32 = arith.truncf %28 : vector<32x128xf32> to vector<32x128xbf16>
    %cst_15 = arith.constant dense<0.000000e+00> : vector<32x128xf32>
    %33 = tpu.matmul %31, %32, %cst_15 {dimension_numbers = #tpu.dot_dimension_numbers<[1], [0], [0], [1], [0, 0, 1, 1], [], []>} : vector<32x32xbf16>, vector<32x128xbf16>, vector<32x128xf32> -> vector<32x128xf32>
    %c1_16 = arith.constant 1 : index
    %c0_17 = arith.constant 0 : index
    %c0_18 = arith.constant 0 : index
    %34 = vector.load %arg5[%c1_16, %c0_17, %c0_18] : memref<2x32x1xf32, #tpu.memory_space<vmem>>, vector<1x32x1xf32>
    %35 = vector.shape_cast %34 : vector<1x32x1xf32> to vector<32x1xf32>
    %36 = vector.broadcast %35 : vector<32x1xf32> to vector<32x128xf32>
    %37 = arith.addf %33, %36 : vector<32x128xf32>
    %cst_19 = arith.constant 0.000000e+00 : f32
    %38 = vector.broadcast %cst_19 : f32 to vector<32x128xf32>
    %39 = arith.maximumf %37, %38 : vector<32x128xf32>
    %c0_20 = arith.constant 0 : index
    %c0_21 = arith.constant 0 : index
    %40 = vector.load %arg6[%c0_20, %c0_21] : memref<8x32xf32, #tpu.memory_space<vmem>>, vector<8x32xf32>
    %41 = arith.truncf %40 : vector<8x32xf32> to vector<8x32xbf16>
    %42 = arith.truncf %39 : vector<32x128xf32> to vector<32x128xbf16>
    %cst_22 = arith.constant dense<0.000000e+00> : vector<8x128xf32>
    %43 = tpu.matmul %41, %42, %cst_22 {dimension_numbers = #tpu.dot_dimension_numbers<[1], [0], [0], [1], [0, 0, 1, 1], [], []>} : vector<8x32xbf16>, vector<32x128xbf16>, vector<8x128xf32> -> vector<8x128xf32>
    %c0_23 = arith.constant 0 : index
    %c0_24 = arith.constant 0 : index
    %44 = vector.load %arg7[%c0_23, %c0_24] : memref<8x1xf32, #tpu.memory_space<vmem>>, vector<8x1xf32>
    %45 = vector.broadcast %44 : vector<8x1xf32> to vector<8x128xf32>
    %46 = arith.addf %43, %45 : vector<8x128xf32>
    %cst_25 = arith.constant 0.000000e+00 : f32
    %47 = vector.broadcast %cst_25 : f32 to vector<8x128xf32>
    %48 = arith.subf %47, %46 : vector<8x128xf32>
    %49 = math.exp %48 : vector<8x128xf32>
    %cst_26 = arith.constant 1.000000e+00 : f32
    %50 = vector.broadcast %cst_26 : f32 to vector<8x128xf32>
    %51 = arith.addf %50, %49 : vector<8x128xf32>
    %cst_27 = arith.constant 1.000000e+00 : f32
    %52 = vector.broadcast %cst_27 : f32 to vector<8x128xf32>
    %53 = arith.divf %52, %51 : vector<8x128xf32>
    %c0_28 = arith.constant 0 : index
    %c0_29 = arith.constant 0 : index
    %54 = vector.load %arg8[%c0_28, %c0_29] : memref<8x128xf32, #tpu.memory_space<vmem>>, vector<8x128xf32>
    tpu.vector_store %arg8[%c0_28, %c0_29], %53 {strides = array<i32>} : memref<8x128xf32, #tpu.memory_space<vmem>>, vector<8x128xf32>,
    return
  }
  func.func @transform_0(%arg0: i32) -> (i32, i32) {
    %c0_i32 = arith.constant 0 : i32
    %c0_i32_0 = arith.constant 0 : i32
    return %c0_i32, %arg0 : i32, i32
  }
  func.func @transform_1(%arg0: i32) -> (i32, i32) {
    %c0_i32 = arith.constant 0 : i32
    %c0_i32_0 = arith.constant 0 : i32
    %c0_i32_1 = arith.constant 0 : i32
    return %c0_i32, %c0_i32_0 : i32, i32
  }
  func.func @transform_2(%arg0: i32) -> (i32, i32) {
    %c0_i32 = arith.constant 0 : i32
    %c0_i32_0 = arith.constant 0 : i32
    %c0_i32_1 = arith.constant 0 : i32
    return %c0_i32, %c0_i32_0 : i32, i32
  }
  func.func @transform_3(%arg0: i32) -> (i32, i32, i32) {
    %c0_i32 = arith.constant 0 : i32
    %c0_i32_0 = arith.constant 0 : i32
    %c0_i32_1 = arith.constant 0 : i32
    %c0_i32_2 = arith.constant 0 : i32
    return %c0_i32, %c0_i32_0, %c0_i32_1 : i32, i32, i32
  }
  func.func @transform_4(%arg0: i32) -> (i32, i32, i32) {
    %c0_i32 = arith.constant 0 : i32
    %c0_i32_0 = arith.constant 0 : i32
    %c0_i32_1 = arith.constant 0 : i32
    %c0_i32_2 = arith.constant 0 : i32
    return %c0_i32, %c0_i32_0, %c0_i32_1 : i32, i32, i32
  }
  func.func @transform_5(%arg0: i32) -> (i32, i32) {
    %c0_i32 = arith.constant 0 : i32
    %c0_i32_0 = arith.constant 0 : i32
    %c0_i32_1 = arith.constant 0 : i32
    return %c0_i32, %c0_i32_0 : i32, i32
  }
  func.func @transform_6(%arg0: i32) -> (i32, i32) {
    %c0_i32 = arith.constant 0 : i32
    %c0_i32_0 = arith.constant 0 : i32
    %c0_i32_1 = arith.constant 0 : i32
    return %c0_i32, %c0_i32_0 : i32, i32
  }
  func.func @transform_7(%arg0: i32) -> (i32, i32) {
    %c0_i32 = arith.constant 0 : i32
    %c0_i32_0 = arith.constant 0 : i32
    return %c0_i32, %arg0 : i32, i32
  }
}

</mosaic_0001>

<llo_original>
// kernel: imgdigest_forward.1
$region0: #{imgdigest_forward.1}
  #allocation0 [shape = 'u32[]', space=smem, size = 0x4, offset = 0x4, fixed_abs, tag = 'smem constant byte address 0x4 - core index']
  #allocation1 [shape = 'u32[144,128]{1,0:T(1,128)}', space=vmem, size = 0x12000, scoped, tag = 'internal scratch']
  %s0 = inlined_call_operand.vmem [shape: f32[2,128], index: 0, kind: input, shape index: {}]
  %s1 = inlined_call_operand.vmem [shape: f32[32,2], index: 1, kind: input, shape index: {}]
  %s2 = inlined_call_operand.vmem [shape: f32[32,1], index: 2, kind: input, shape index: {}]
  %s3 = inlined_call_operand.vmem [shape: f32[2,32,32], index: 3, kind: input, shape index: {}]
  %s4 = inlined_call_operand.vmem [shape: f32[2,32,1], index: 4, kind: input, shape index: {}]
  %s5 = inlined_call_operand.vmem [shape: f32[8,32], index: 5, kind: input, shape index: {}]
  %s6 = inlined_call_operand.vmem [shape: f32[8,1], index: 6, kind: input, shape index: {}]
  %s7 = inlined_call_operand.vmem [shape: f32[8,128], index: 7, kind: output, shape index: {}]
  %s8 = sld [smem:[#allocation0]]
  $region38: #{imgdigest_forward.1} parent=0
    _
  %s10 = ssub.s32 1, %s8
  %s11 = scalar_select 0, %s10, %s8
  // Predicated region
  $region2: #{imgdigest_forward.1} parent=0 // pred_check
    _
  $region3: #{imgdigest_forward.1} parent=0 // pred_check_branch
    %13 = sbr.rel (0) target = $region5
  $region4: #{imgdigest_forward.1} parent=0 // pred_region
    _
  $region5: #{imgdigest_forward.1} parent=0 // pred_fallthru
    _
  // Predicated region
  $region6: #{imgdigest_forward.1} parent=0 // pred_check
    _
  $region7: #{imgdigest_forward.1} parent=0 // pred_check_branch
    %15 = sbr.rel (0) target = $region9
  $region8: #{imgdigest_forward.1} parent=0 // pred_region
    _
  $region9: #{imgdigest_forward.1} parent=0 // pred_fallthru
    _
  // Predicated region
  $region10: #{imgdigest_forward.1} parent=0 // pred_check
    _
  $region11: #{imgdigest_forward.1} parent=0 // pred_check_branch
    %17 = sbr.rel (0) target = $region13
  $region12: #{imgdigest_forward.1} parent=0 // pred_region
    _
  $region13: #{imgdigest_forward.1} parent=0 // pred_fallthru
    _
  // Predicated region
  $region14: #{imgdigest_forward.1} parent=0 // pred_check
    _
  $region15: #{imgdigest_forward.1} parent=0 // pred_check_branch
    %19 = sbr.rel (0) target = $region17
  $region16: #{imgdigest_forward.1} parent=0 // pred_region
    _
  $region17: #{imgdigest_forward.1} parent=0 // pred_fallthru
    _
  // Predicated region
  $region18: #{imgdigest_forward.1} parent=0 // pred_check
    _
  $region19: #{imgdigest_forward.1} parent=0 // pred_check_branch
    %21 = sbr.rel (0) target = $region21
  $region20: #{imgdigest_forward.1} parent=0 // pred_region
    _
  $region21: #{imgdigest_forward.1} parent=0 // pred_fallthru
    _
  // Predicated region
  $region22: #{imgdigest_forward.1} parent=0 // pred_check
    _
  $region23: #{imgdigest_forward.1} parent=0 // pred_check_branch
    %23 = sbr.rel (0) target = $region25
  $region24: #{imgdigest_forward.1} parent=0 // pred_region
    _
  $region25: #{imgdigest_forward.1} parent=0 // pred_fallthru
    _
  // Predicated region
  $region26: #{imgdigest_forward.1} parent=0 // pred_check
    _
  $region27: #{imgdigest_forward.1} parent=0 // pred_check_branch
    %25 = sbr.rel (0) target = $region29
  $region28: #{imgdigest_forward.1} parent=0 // pred_region
    _
  $region29: #{imgdigest_forward.1} parent=0 // pred_fallthru
    _
  %v27 = vld [vmem:[%s0] sm:$0x3]
  %v28 = vld [vmem:[%s1] sm:$0xff]
  %v29 = vld [vmem:[%s1 + $0x8] sm:$0xff]
  %v30 = vld [vmem:[%s1 + $0x10] sm:$0xff]
  %v31 = vld [vmem:[%s1 + $0x18] sm:$0xff]
  %33 = vset.pattern.permute.xlu0 0
  %34 = vperm.xlu0 %33, %v28
  %v35 = vpop.permute.xlu0 %34
  %38 = vset.pattern.permute.xlu0 0
  %39 = vperm.xlu0 %38, %v29
  %v40 = vpop.permute.xlu0 %39
  %43 = vset.pattern.permute.xlu0 0
  %44 = vperm.xlu0 %43, %v30
  %v45 = vpop.permute.xlu0 %44
  %48 = vset.pattern.permute.xlu0 0
  %49 = vperm.xlu0 %48, %v31
  %v50 = vpop.permute.xlu0 %49
  %v52 = vlaneseq
  %v53 = vshrl.u32 %v52, 7
  %v54 = vsub.s32 0, %v53
  %v55 = vrot.slane %v27, %v54
  %v56 = vmul.f32 %v35, %v55
  %v57 = vmul.f32 %v40, %v55
  %v58 = vmul.f32 %v45, %v55
  %v59 = vmul.f32 %v50, %v55
  %60 = vset.pattern.permute.xlu0 1
  %61 = vperm.xlu0 %60, %v28
  %v62 = vpop.permute.xlu0 %61
  %64 = vset.pattern.permute.xlu0 1
  %65 = vperm.xlu0 %64, %v29
  %v66 = vpop.permute.xlu0 %65
  %68 = vset.pattern.permute.xlu0 1
  %69 = vperm.xlu0 %68, %v30
  %v70 = vpop.permute.xlu0 %69
  %72 = vset.pattern.permute.xlu0 1
  %73 = vperm.xlu0 %72, %v31
  %v74 = vpop.permute.xlu0 %73
  %v76 = vlaneseq
  %v77 = vshrl.u32 %v76, 7
  %v78 = vsub.s32 1, %v77
  %v79 = vrot.slane %v27, %v78
  %v80 = vmul.f32 %v62, %v79
  %v81 = vmul.f32 %v66, %v79
  %v82 = vmul.f32 %v70, %v79
  %v83 = vmul.f32 %v74, %v79
  %v84 = vadd.f32 %v56, %v80
  %v85 = vadd.f32 %v57, %v81
  %v86 = vadd.f32 %v58, %v82
  %v87 = vadd.f32 %v59, %v83
  %v88 = vld [vmem:[%s2] sm:$0xff]
  %v89 = vld [vmem:[%s2 + $0x8] sm:$0xff]
  %v90 = vld [vmem:[%s2 + $0x10] sm:$0xff]
  %v91 = vld [vmem:[%s2 + $0x18] sm:$0xff]
  %93 = vset.pattern.permute.xlu0 0
  %94 = vperm.xlu0 %93, %v88
  %v95 = vpop.permute.xlu0 %94
  %98 = vset.pattern.permute.xlu0 0
  %99 = vperm.xlu0 %98, %v89
  %v100 = vpop.permute.xlu0 %99
  %103 = vset.pattern.permute.xlu0 0
  %104 = vperm.xlu0 %103, %v90
  %v105 = vpop.permute.xlu0 %104
  %108 = vset.pattern.permute.xlu0 0
  %109 = vperm.xlu0 %108, %v91
  %v110 = vpop.permute.xlu0 %109
  %v112 = vadd.f32 %v84, %v95
  %v113 = vadd.f32 %v85, %v100
  %v114 = vadd.f32 %v86, %v105
  %v115 = vadd.f32 %v87, %v110
  %v116 = vmax.f32 %v112, 0.0
  %v117 = vmax.f32 %v113, 0.0
  %v118 = vmax.f32 %v114, 0.0
  %v119 = vmax.f32 %v115, 0.0
  %v120 = vld [vmem:[%s3] sm:$0xff]
  %v121 = vld [vmem:[%s3 + $0x8] sm:$0xff]
  %v122 = vld [vmem:[%s3 + $0x10] sm:$0xff]
  %v123 = vld [vmem:[%s3 + $0x18] sm:$0xff]
  %v124 = vpack.c.bf16 %v121, %v120
  %v125 = vpack.c.bf16 %v123, %v122
  %v126 = vpack.c.bf16 %v117, %v116
  %v127 = vpack.c.bf16 %v119, %v118
  %v128 = vld [vmem:[%s4] sm:$0xff]
  %v129 = vld [vmem:[%s4 + $0x8] sm:$0xff]
  %v130 = vld [vmem:[%s4 + $0x10] sm:$0xff]
  %v131 = vld [vmem:[%s4 + $0x18] sm:$0xff]
  %133 = vset.pattern.permute.xlu0 0
  %134 = vperm.xlu0 %133, %v128
  %v135 = vpop.permute.xlu0 %134
  %138 = vset.pattern.permute.xlu0 0
  %139 = vperm.xlu0 %138, %v129
  %v140 = vpop.permute.xlu0 %139
  %143 = vset.pattern.permute.xlu0 0
  %144 = vperm.xlu0 %143, %v130
  %v145 = vpop.permute.xlu0 %144
  %148 = vset.pattern.permute.xlu0 0
  %149 = vperm.xlu0 %148, %v131
  %v150 = vpop.permute.xlu0 %149
  %vm152 = vcmask 261120
  %v154 = vsel %vm152, %v124, 0
  %v157 = vsel %vm152, %v125, 0
  %159 = vmatprep.subr.bf16.mxu0 0
  %160 = vmatpush1.bf16.msra.mxu0 %v126
  %161 = vmatprep.subr.bf16.mxu0 0
  %162 = vmatpush1.bf16.msra.mxu0 %v127
  %163 = vmatprep.subr.bf16.mxu0 0
  %164 = vmatpush1.bf16.msra.mxu0 0
  %165 = vmatprep.subr.bf16.mxu0 0
  %166 = vmatpush1.bf16.msra.mxu0 0
  %167 = vmatprep.subr.bf16.mxu0 0
  %168 = vmatpush1.bf16.msra.mxu0 0
  %169 = vmatprep.subr.bf16.mxu0 0
  %170 = vmatpush1.bf16.msra.mxu0 0
  %171 = vmatprep.subr.bf16.mxu0 0
  %172 = vmatpush1.bf16.msra.mxu0 0
  %173 = vmatprep.subr.bf16.mxu0 0
  %174 = vmatpush1.bf16.msra.mxu0 0
  %175 = vmatprep.subr.bf16.mxu0 0
  %176 = vmatpush1.bf16.msra.mxu0 0
  %177 = vmatprep.subr.bf16.mxu0 0
  %178 = vmatpush1.bf16.msra.mxu0 0
  %179 = vmatprep.subr.bf16.mxu0 0
  %180 = vmatpush1.bf16.msra.mxu0 0
  %181 = vmatprep.subr.bf16.mxu0 0
  %182 = vmatpush1.bf16.msra.mxu0 0
  %183 = vmatprep.subr.bf16.mxu0 0
  %184 = vmatpush1.bf16.msra.mxu0 0
  %185 = vmatprep.subr.bf16.mxu0 0
  %186 = vmatpush1.bf16.msra.mxu0 0
  %187 = vmatprep.subr.bf16.mxu0 0
  %188 = vmatpush1.bf16.msra.mxu0 0
  %189 = vmatprep.subr.bf16.mxu0 0
  %190 = vmatpush1.bf16.msra.mxu0 0
  %191 = vmatprep.mubr.bf16.mxu0 0
  %192 = vmatmul.mubr.bf16.gmra.mrb[0].mxu0 %v154
  %v193 = vpop.f32.mrb[0].mxu0
  %v194 = vadd.f32 %v135, %v193
  %v195 = vpop.f32.mrb[0].mxu0
  %v196 = vpop.f32.mrb[0].mxu0
  %v197 = vadd.f32 %v140, %v196
  %v198 = vpop.f32.mrb[0].mxu0
  %199 = vmatprep.mubr.bf16.mxu0 0
  %200 = vmatmul.mubr.bf16.gmra.mrb[0].mxu0 %v157
  %v201 = vpop.f32.mrb[0].mxu0
  %v202 = vadd.f32 %v145, %v201
  %v203 = vpop.f32.mrb[0].mxu0
  %v204 = vpop.f32.mrb[0].mxu0
  %v205 = vadd.f32 %v150, %v204
  %v206 = vpop.f32.mrb[0].mxu0
  %207 = vdwg.mxu0
  %v208 = vmax.f32 %v194, 0.0
  %v209 = vmax.f32 %v197, 0.0
  %v210 = vmax.f32 %v202, 0.0
  %v211 = vmax.f32 %v205, 0.0
  %s212 = scalar_lea.vmem %s3, 32
  %v213 = vld [vmem:[%s212] sm:$0xff]
  %v214 = vld [vmem:[%s212 + $0x8] sm:$0xff]
  %v215 = vld [vmem:[%s212 + $0x10] sm:$0xff]
  %v216 = vld [vmem:[%s212 + $0x18] sm:$0xff]
  %v217 = vpack.c.bf16 %v214, %v213
  %v218 = vpack.c.bf16 %v216, %v215
  %v219 = vpack.c.bf16 %v209, %v208
  %v220 = vpack.c.bf16 %v211, %v210
  %s221 = scalar_lea.vmem %s4, 32
  %v222 = vld [vmem:[%s221] sm:$0xff]
  %v223 = vld [vmem:[%s221 + $0x8] sm:$0xff]
  %v224 = vld [vmem:[%s221 + $0x10] sm:$0xff]
  %v225 = vld [vmem:[%s221 + $0x18] sm:$0xff]
  %227 = vset.pattern.permute.xlu0 0
  %228 = vperm.xlu0 %227, %v222
  %v229 = vpop.permute.xlu0 %228
  %232 = vset.pattern.permute.xlu0 0
  %233 = vperm.xlu0 %232, %v223
  %v234 = vpop.permute.xlu0 %233
  %237 = vset.pattern.permute.xlu0 0
  %238 = vperm.xlu0 %237, %v224
  %v239 = vpop.permute.xlu0 %238
  %242 = vset.pattern.permute.xlu0 0
  %243 = vperm.xlu0 %242, %v225
  %v244 = vpop.permute.xlu0 %243
  %v247 = vsel %vm152, %v217, 0
  %v250 = vsel %vm152, %v218, 0
  %252 = vmatprep.subr.bf16.mxu0 0
  %253 = vmatpush1.bf16.msra.mxu0 %v219
  %254 = vmatprep.subr.bf16.mxu0 0
  %255 = vmatpush1.bf16.msra.mxu0 %v220
  %256 = vmatprep.subr.bf16.mxu0 0
  %257 = vmatpush1.bf16.msra.mxu0 0
  %258 = vmatprep.subr.bf16.mxu0 0
  %259 = vmatpush1.bf16.msra.mxu0 0
  %260 = vmatprep.subr.bf16.mxu0 0
  %261 = vmatpush1.bf16.msra.mxu0 0
  %262 = vmatprep.subr.bf16.mxu0 0
  %263 = vmatpush1.bf16.msra.mxu0 0
  %264 = vmatprep.subr.bf16.mxu0 0
  %265 = vmatpush1.bf16.msra.mxu0 0
  %266 = vmatprep.subr.bf16.mxu0 0
  %267 = vmatpush1.bf16.msra.mxu0 0
  %268 = vmatprep.subr.bf16.mxu0 0
  %269 = vmatpush1.bf16.msra.mxu0 0
  %270 = vmatprep.subr.bf16.mxu0 0
  %271 = vmatpush1.bf16.msra.mxu0 0
  %272 = vmatprep.subr.bf16.mxu0 0
  %273 = vmatpush1.bf16.msra.mxu0 0
  %274 = vmatprep.subr.bf16.mxu0 0
  %275 = vmatpush1.bf16.msra.mxu0 0
  %276 = vmatprep.subr.bf16.mxu0 0
  %277 = vmatpush1.bf16.msra.mxu0 0
  %278 = vmatprep.subr.bf16.mxu0 0
  %279 = vmatpush1.bf16.msra.mxu0 0
  %280 = vmatprep.subr.bf16.mxu0 0
  %281 = vmatpush1.bf16.msra.mxu0 0
  %282 = vmatprep.subr.bf16.mxu0 0
  %283 = vmatpush1.bf16.msra.mxu0 0
  %284 = vmatprep.mubr.bf16.mxu0 0
  %285 = vmatmul.mubr.bf16.gmra.mrb[0].mxu0 %v247
  %v286 = vpop.f32.mrb[0].mxu0
  %v287 = vadd.f32 %v229, %v286
  %v288 = vpop.f32.mrb[0].mxu0
  %v289 = vpop.f32.mrb[0].mxu0
  %v290 = vadd.f32 %v234, %v289
  %v291 = vpop.f32.mrb[0].mxu0
  %292 = vmatprep.mubr.bf16.mxu0 0
  %293 = vmatmul.mubr.bf16.gmra.mrb[0].mxu0 %v250
  %v294 = vpop.f32.mrb[0].mxu0
  %v295 = vadd.f32 %v239, %v294
  %v296 = vpop.f32.mrb[0].mxu0
  %v297 = vpop.f32.mrb[0].mxu0
  %v298 = vadd.f32 %v244, %v297
  %v299 = vpop.f32.mrb[0].mxu0
  %300 = vdwg.mxu0
  %v301 = vmax.f32 %v287, 0.0
  %v302 = vmax.f32 %v290, 0.0
  %v303 = vmax.f32 %v295, 0.0
  %v304 = vmax.f32 %v298, 0.0
  %v305 = vld [vmem:[%s5] sm:$0xff]
  %v306 = vpack.c.bf16 %v305, %v305
  %v307 = vpack.c.bf16 %v302, %v301
  %v308 = vpack.c.bf16 %v304, %v303
  %v309 = vld [vmem:[%s6] sm:$0xff]
  %311 = vset.pattern.permute.xlu0 0
  %312 = vperm.xlu0 %311, %v309
  %v313 = vpop.permute.xlu0 %312
  %v316 = vsel %vm152, %v306, 0
  %318 = vmatprep.subr.bf16.mxu0 0
  %319 = vmatpush1.bf16.msra.mxu0 %v307
  %320 = vmatprep.subr.bf16.mxu0 0
  %321 = vmatpush1.bf16.msra.mxu0 %v308
  %322 = vmatprep.subr.bf16.mxu0 0
  %323 = vmatpush1.bf16.msra.mxu0 0
  %324 = vmatprep.subr.bf16.mxu0 0
  %325 = vmatpush1.bf16.msra.mxu0 0
  %326 = vmatprep.subr.bf16.mxu0 0
  %327 = vmatpush1.bf16.msra.mxu0 0
  %328 = vmatprep.subr.bf16.mxu0 0
  %329 = vmatpush1.bf16.msra.mxu0 0
  %330 = vmatprep.subr.bf16.mxu0 0
  %331 = vmatpush1.bf16.msra.mxu0 0
  %332 = vmatprep.subr.bf16.mxu0 0
  %333 = vmatpush1.bf16.msra.mxu0 0
  %334 = vmatprep.subr.bf16.mxu0 0
  %335 = vmatpush1.bf16.msra.mxu0 0
  %336 = vmatprep.subr.bf16.mxu0 0
  %337 = vmatpush1.bf16.msra.mxu0 0
  %338 = vmatprep.subr.bf16.mxu0 0
  %339 = vmatpush1.bf16.msra.mxu0 0
  %340 = vmatprep.subr.bf16.mxu0 0
  %341 = vmatpush1.bf16.msra.mxu0 0
  %342 = vmatprep.subr.bf16.mxu0 0
  %343 = vmatpush1.bf16.msra.mxu0 0
  %344 = vmatprep.subr.bf16.mxu0 0
  %345 = vmatpush1.bf16.msra.mxu0 0
  %346 = vmatprep.subr.bf16.mxu0 0
  %347 = vmatpush1.bf16.msra.mxu0 0
  %348 = vmatprep.subr.bf16.mxu0 0
  %349 = vmatpush1.bf16.msra.mxu0 0
  %350 = vmatprep.mubr.bf16.mxu0 0
  %351 = vmatmul.mubr.bf16.gmra.mrb[0].mxu0 %v316
  %v352 = vpop.f32.mrb[0].mxu0
  %v353 = vadd.f32 %v313, %v352
  %v354 = vpop.f32.mrb[0].mxu0
  %v355 = vpop.f32.mrb[0].mxu0
  %v356 = vpop.f32.mrb[0].mxu0
  %357 = vdwg.mxu0
  %v358 = vsub.f32 0.0, %v353
  %v359 = vmul.f32 %v358, 1.442695
  %v360 = vpow.pop %v359
  %v361 = vadd.f32 %v360, 1.0
  %v362 = vrcp.pop %v361
  %v363 = vmul.f32 1.0, %v362
  %364 = vst [vmem:[%s7] sm:$0xff] %v363
  // Predicated region
  $region30: #{imgdigest_forward.1} parent=0 // pred_check
    _
  $region31: #{imgdigest_forward.1} parent=0 // pred_check_branch
    %366 = sbr.rel (0) target = $region33
  $region32: #{imgdigest_forward.1} parent=0 // pred_region
    _
  $region33: #{imgdigest_forward.1} parent=0 // pred_fallthru
    _
  // Predicated region
  $region34: #{imgdigest_forward.1} parent=0 // pred_check
    _
  $region35: #{imgdigest_forward.1} parent=0 // pred_check_branch
    %368 = sbr.rel (0) target = $region37
  $region36: #{imgdigest_forward.1} parent=0 // pred_region
    _
  $region37: #{imgdigest_forward.1} parent=0 // pred_fallthru
    _

</llo_original>
